<compile_context>
chip_gen: v7x
topology: tpu7x:2x2x1
jax: 0.10.0
libtpu: 0.0.40
codegen_flags: <defaults>
</compile_context>

<pallas_src>
import functools

import jax
import jax.numpy as jnp
from jax import lax
from jax.experimental import pallas as pl
from jax.experimental.pallas import tpu as pltpu  # noqa: F401  (TPU backend)


def _attn_kernel(x_ref, w_ref, b_ref, o_ref, *, n_batch, n_heads, seq, d_model):
    # x_ref: (B*N*S, D)  -- flattened in the wrapper (free view)
    # w_ref: (D, 3D)     -- fused [Wq|Wk|Wv], already transposed (y = x @ W + b)
    # b_ref: (1, 3D)     -- fused bias
    # o_ref: (B*S, N*D)  -- row-major identical to (B, S, N, D): permute folded in
    B, N, S, D = n_batch, n_heads, seq, d_model

    x = x_ref[...]                                                     # (B*N*S, D)

    # Single fused QKV projection: one MXU push for the whole batch.
    qkv = jnp.dot(x, w_ref[...], preferred_element_type=jnp.float32) + b_ref[...]

    batch_slabs = []                                    # per-batch (S, N*D) slabs
    for b in range(B):
        head_outs = []
        for n in range(N):
            g = b * N + n
            # Static, sublane-aligned row slice (S == 8 rows): free.
            blk = qkv[g * S:(g + 1) * S, :]                            # (S, 3D)
            q = blk[:, 0 * D:1 * D]                                    # (S, D)
            k = blk[:, 1 * D:2 * D]
            v = blk[:, 2 * D:3 * D]

            # Scores: contract trailing dims (module applies NO 1/sqrt(d) scale).
            s = lax.dot_general(q, k, (((1,), (1,)), ((), ())),
                                preferred_element_type=jnp.float32)    # (S, S)

            # Softmax along last axis.
            m = jnp.max(s, axis=-1, keepdims=True)
            e = jnp.exp(s - m)
            denom = jnp.sum(e, axis=-1, keepdims=True)
            r = pl.reciprocal(denom, approx=True)        # EUP vrcp (idle slot)
            r = r * (2.0 - denom * r)                    # one Newton step -> ~f32 exact
            p = e * r

            # Dropout(p=0.5) == identity (eval mode).

            head_outs.append(jnp.dot(p, v, preferred_element_type=jnp.float32))

        # Heads side by side along lanes -> (S, N*D): the permute(0,2,1,3) layout.
        batch_slabs.append(jnp.concatenate(head_outs, axis=1))

    # Single lane-dense store of the whole output (no per-head strided stores).
    o_ref[...] = jnp.concatenate(batch_slabs, axis=0).astype(o_ref.dtype)


def pack_qkv_params(wq_t, wk_t, wv_t, bq, bk, bv):
    """One-time packing of the three Linear layers into fused weight/bias."""
    w_qkv = jnp.concatenate([wq_t, wk_t, wv_t], axis=1)                # (D, 3D)
    b_qkv = jnp.concatenate([bq, bk, bv], axis=0).reshape(1, -1)       # (1, 3D)
    return w_qkv, b_qkv


@jax.jit
def self_attention_pallas(x, w_qkv, b_qkv):
    """x: [B, N, S, D] float32; w_qkv: [D, 3D]; b_qkv: [1, 3D].
    Returns [B, S*N, D] matching the PyTorch module's output."""
    B, N, S, D = x.shape

    # Free contiguous view: the kernel receives a clean 2-D operand.
    x2d = x.reshape(B * N * S, D)

    kernel = functools.partial(_attn_kernel,
                               n_batch=B, n_heads=N, seq=S, d_model=D)

    out = pl.pallas_call(
        kernel,
        out_shape=jax.ShapeDtypeStruct((B * S, N * D), x.dtype),
        # Single grid step: whole problem resident in VMEM, no per-step overhead.
        in_specs=[
            pl.BlockSpec((B * N * S, D), lambda: (0, 0)),
            pl.BlockSpec((D, 3 * D), lambda: (0, 0)),
            pl.BlockSpec((1, 3 * D), lambda: (0, 0)),
        ],
        out_specs=pl.BlockSpec((B * S, N * D), lambda: (0, 0)),
    )(x2d, w_qkv, b_qkv)

    # (B*S, N*D) row-major == (B, S, N, D) row-major -> free view to (B, S*N, D).
    return out.reshape(B, S * N, D)


def _reference(x, wq_t, wk_t, wv_t, bq, bk, bv):
    q = x @ wq_t + bq
    k = x @ wk_t + bk
    v = x @ wv_t + bv
    qk = jnp.einsum("bnsd,bntd->bnst", q, k)
    p = jax.nn.softmax(qk, axis=-1)
    out = jnp.einsum("bnst,bntd->bnsd", p, v)
    B, N, S, D = out.shape
    return jnp.transpose(out, (0, 2, 1, 3)).reshape(B, S * N, D)


if __name__ == "__main__":
    num_heads = 2
    d_model = 32
    B, S = 2, 8

    key = jax.random.PRNGKey(0)
    k_x, k_wq, k_wk, k_wv, k_bq, k_bk, k_bv = jax.random.split(key, 7)

    # x1: [B, num_heads, S, d_model]
    x = jax.random.normal(k_x, (B, num_heads, S, d_model), dtype=jnp.float32)

    # nn.Linear-style deterministic init; store transposed weights (y = x @ W^T + b)
    bound = 1.0 / (d_model ** 0.5)
    wq_t = jax.random.uniform(k_wq, (d_model, d_model), jnp.float32, -bound, bound)
    wk_t = jax.random.uniform(k_wk, (d_model, d_model), jnp.float32, -bound, bound)
    wv_t = jax.random.uniform(k_wv, (d_model, d_model), jnp.float32, -bound, bound)
    bq = jax.random.uniform(k_bq, (d_model,), jnp.float32, -bound, bound)
    bk = jax.random.uniform(k_bk, (d_model,), jnp.float32, -bound, bound)
    bv = jax.random.uniform(k_bv, (d_model,), jnp.float32, -bound, bound)

    # One-time parameter packing (hoisted out of the per-call path).
    w_qkv, b_qkv = pack_qkv_params(wq_t, wk_t, wv_t, bq, bk, bv)

    out = self_attention_pallas(x, w_qkv, b_qkv)
    out = jax.block_until_ready(out)

    ref = _reference(x, wq_t, wk_t, wv_t, bq, bk, bv)
    assert out.shape == (B, S * num_heads, d_model), out.shape
    assert jnp.allclose(out, ref, atol=1e-4, rtol=1e-4), "mismatch vs reference"

    print("KERNEL_OK")
</pallas_src>

<mosaic_0001>
module attributes {stable_mosaic.version = 11 : i64} {
  func.func @_attn_kernel(%arg0: memref<32x32xf32, #tpu.memory_space<vmem>>, %arg1: memref<32x96xf32, #tpu.memory_space<vmem>>, %arg2: memref<1x96xf32, #tpu.memory_space<vmem>>, %arg3: memref<16x64xf32, #tpu.memory_space<vmem>>) attributes {dimension_semantics = [], scalar_prefetch = 0 : i64, scratch_operands = 0 : i64, tpu.core_type = #tpu.core_type<tc>} {
    %c0 = arith.constant 0 : index
    %c0_0 = arith.constant 0 : index
    %0 = vector.load %arg0[%c0, %c0_0] : memref<32x32xf32, #tpu.memory_space<vmem>>, vector<32x32xf32>
    %c0_1 = arith.constant 0 : index
    %c0_2 = arith.constant 0 : index
    %1 = vector.load %arg1[%c0_1, %c0_2] : memref<32x96xf32, #tpu.memory_space<vmem>>, vector<32x96xf32>
    %cst = arith.constant dense<0.000000e+00> : vector<32x96xf32>
    %2 = tpu.matmul %0, %1, %cst {dimension_numbers = #tpu.dot_dimension_numbers<[1], [0], [0], [1], [0, 0, 1, 1], [], []>} : vector<32x32xf32>, vector<32x96xf32>, vector<32x96xf32> -> vector<32x96xf32>
    %c0_3 = arith.constant 0 : index
    %c0_4 = arith.constant 0 : index
    %3 = vector.load %arg2[%c0_3, %c0_4] : memref<1x96xf32, #tpu.memory_space<vmem>>, vector<1x96xf32>
    %4 = vector.broadcast %3 : vector<1x96xf32> to vector<32x96xf32>
    %5 = arith.addf %2, %4 : vector<32x96xf32>
    %6 = vector.extract_strided_slice %5 {offsets = [0, 0], sizes = [8, 96], strides = [1, 1]} : vector<32x96xf32> to vector<8x96xf32>
    %7 = vector.extract_strided_slice %6 {offsets = [0, 0], sizes = [8, 32], strides = [1, 1]} : vector<8x96xf32> to vector<8x32xf32>
    %8 = vector.extract_strided_slice %6 {offsets = [0, 32], sizes = [8, 32], strides = [1, 1]} : vector<8x96xf32> to vector<8x32xf32>
    %9 = vector.extract_strided_slice %6 {offsets = [0, 64], sizes = [8, 32], strides = [1, 1]} : vector<8x96xf32> to vector<8x32xf32>
    %cst_5 = arith.constant dense<0.000000e+00> : vector<8x8xf32>
    %10 = tpu.matmul %7, %8, %cst_5 {dimension_numbers = #tpu.dot_dimension_numbers<[1], [1], [0], [0], [0, 0, 1, 0], [], []>} : vector<8x32xf32>, vector<8x32xf32>, vector<8x8xf32> -> vector<8x8xf32>
    %cst_6 = arith.constant dense<0xFF800000> : vector<8xf32>
    %11 = vector.multi_reduction <maximumf>, %10, %cst_6 [1] : vector<8x8xf32> to vector<8xf32>
    %12 = vector.shape_cast %11 : vector<8xf32> to vector<8x1xf32>
    %13 = vector.broadcast %12 : vector<8x1xf32> to vector<8x8xf32>
    %14 = arith.subf %10, %13 : vector<8x8xf32>
    %15 = math.exp %14 : vector<8x8xf32>
    %cst_7 = arith.constant dense<0.000000e+00> : vector<8xf32>
    %16 = vector.multi_reduction <add>, %15, %cst_7 [1] : vector<8x8xf32> to vector<8xf32>
    %17 = vector.shape_cast %16 : vector<8xf32> to vector<8x1xf32>
    %18 = tpu.reciprocal %17 {approx = true} : vector<8x1xf32> -> vector<8x1xf32>
    %19 = arith.mulf %17, %18 : vector<8x1xf32>
    %cst_8 = arith.constant 2.000000e+00 : f32
    %20 = vector.broadcast %cst_8 : f32 to vector<8x1xf32>
    %21 = arith.subf %20, %19 : vector<8x1xf32>
    %22 = arith.mulf %18, %21 : vector<8x1xf32>
    %23 = vector.broadcast %22 : vector<8x1xf32> to vector<8x8xf32>
    %24 = arith.mulf %15, %23 : vector<8x8xf32>
    %cst_9 = arith.constant dense<0.000000e+00> : vector<8x32xf32>
    %25 = tpu.matmul %24, %9, %cst_9 {dimension_numbers = #tpu.dot_dimension_numbers<[1], [0], [0], [1], [0, 0, 1, 1], [], []>} : vector<8x8xf32>, vector<8x32xf32>, vector<8x32xf32> -> vector<8x32xf32>
    %26 = vector.extract_strided_slice %5 {offsets = [8, 0], sizes = [8, 96], strides = [1, 1]} : vector<32x96xf32> to vector<8x96xf32>
    %27 = vector.extract_strided_slice %26 {offsets = [0, 0], sizes = [8, 32], strides = [1, 1]} : vector<8x96xf32> to vector<8x32xf32>
    %28 = vector.extract_strided_slice %26 {offsets = [0, 32], sizes = [8, 32], strides = [1, 1]} : vector<8x96xf32> to vector<8x32xf32>
    %29 = vector.extract_strided_slice %26 {offsets = [0, 64], sizes = [8, 32], strides = [1, 1]} : vector<8x96xf32> to vector<8x32xf32>
    %cst_10 = arith.constant dense<0.000000e+00> : vector<8x8xf32>
    %30 = tpu.matmul %27, %28, %cst_10 {dimension_numbers = #tpu.dot_dimension_numbers<[1], [1], [0], [0], [0, 0, 1, 0], [], []>} : vector<8x32xf32>, vector<8x32xf32>, vector<8x8xf32> -> vector<8x8xf32>
    %cst_11 = arith.constant dense<0xFF800000> : vector<8xf32>
    %31 = vector.multi_reduction <maximumf>, %30, %cst_11 [1] : vector<8x8xf32> to vector<8xf32>
    %32 = vector.shape_cast %31 : vector<8xf32> to vector<8x1xf32>
    %33 = vector.broadcast %32 : vector<8x1xf32> to vector<8x8xf32>
    %34 = arith.subf %30, %33 : vector<8x8xf32>
    %35 = math.exp %34 : vector<8x8xf32>
    %cst_12 = arith.constant dense<0.000000e+00> : vector<8xf32>
    %36 = vector.multi_reduction <add>, %35, %cst_12 [1] : vector<8x8xf32> to vector<8xf32>
    %37 = vector.shape_cast %36 : vector<8xf32> to vector<8x1xf32>
    %38 = tpu.reciprocal %37 {approx = true} : vector<8x1xf32> -> vector<8x1xf32>
    %39 = arith.mulf %37, %38 : vector<8x1xf32>
    %cst_13 = arith.constant 2.000000e+00 : f32
    %40 = vector.broadcast %cst_13 : f32 to vector<8x1xf32>
    %41 = arith.subf %40, %39 : vector<8x1xf32>
    %42 = arith.mulf %38, %41 : vector<8x1xf32>
    %43 = vector.broadcast %42 : vector<8x1xf32> to vector<8x8xf32>
    %44 = arith.mulf %35, %43 : vector<8x8xf32>
    %cst_14 = arith.constant dense<0.000000e+00> : vector<8x32xf32>
    %45 = tpu.matmul %44, %29, %cst_14 {dimension_numbers = #tpu.dot_dimension_numbers<[1], [0], [0], [1], [0, 0, 1, 1], [], []>} : vector<8x8xf32>, vector<8x32xf32>, vector<8x32xf32> -> vector<8x32xf32>
    %46 = tpu.concatenate %25, %45 in 1 : vector<8x32xf32>, vector<8x32xf32> -> vector<8x64xf32>
    %47 = vector.extract_strided_slice %5 {offsets = [16, 0], sizes = [8, 96], strides = [1, 1]} : vector<32x96xf32> to vector<8x96xf32>
    %48 = vector.extract_strided_slice %47 {offsets = [0, 0], sizes = [8, 32], strides = [1, 1]} : vector<8x96xf32> to vector<8x32xf32>
    %49 = vector.extract_strided_slice %47 {offsets = [0, 32], sizes = [8, 32], strides = [1, 1]} : vector<8x96xf32> to vector<8x32xf32>
    %50 = vector.extract_strided_slice %47 {offsets = [0, 64], sizes = [8, 32], strides = [1, 1]} : vector<8x96xf32> to vector<8x32xf32>
    %cst_15 = arith.constant dense<0.000000e+00> : vector<8x8xf32>
    %51 = tpu.matmul %48, %49, %cst_15 {dimension_numbers = #tpu.dot_dimension_numbers<[1], [1], [0], [0], [0, 0, 1, 0], [], []>} : vector<8x32xf32>, vector<8x32xf32>, vector<8x8xf32> -> vector<8x8xf32>
    %cst_16 = arith.constant dense<0xFF800000> : vector<8xf32>
    %52 = vector.multi_reduction <maximumf>, %51, %cst_16 [1] : vector<8x8xf32> to vector<8xf32>
    %53 = vector.shape_cast %52 : vector<8xf32> to vector<8x1xf32>
    %54 = vector.broadcast %53 : vector<8x1xf32> to vector<8x8xf32>
    %55 = arith.subf %51, %54 : vector<8x8xf32>
    %56 = math.exp %55 : vector<8x8xf32>
    %cst_17 = arith.constant dense<0.000000e+00> : vector<8xf32>
    %57 = vector.multi_reduction <add>, %56, %cst_17 [1] : vector<8x8xf32> to vector<8xf32>
    %58 = vector.shape_cast %57 : vector<8xf32> to vector<8x1xf32>
    %59 = tpu.reciprocal %58 {approx = true} : vector<8x1xf32> -> vector<8x1xf32>
    %60 = arith.mulf %58, %59 : vector<8x1xf32>
    %cst_18 = arith.constant 2.000000e+00 : f32
    %61 = vector.broadcast %cst_18 : f32 to vector<8x1xf32>
    %62 = arith.subf %61, %60 : vector<8x1xf32>
    %63 = arith.mulf %59, %62 : vector<8x1xf32>
    %64 = vector.broadcast %63 : vector<8x1xf32> to vector<8x8xf32>
    %65 = arith.mulf %56, %64 : vector<8x8xf32>
    %cst_19 = arith.constant dense<0.000000e+00> : vector<8x32xf32>
    %66 = tpu.matmul %65, %50, %cst_19 {dimension_numbers = #tpu.dot_dimension_numbers<[1], [0], [0], [1], [0, 0, 1, 1], [], []>} : vector<8x8xf32>, vector<8x32xf32>, vector<8x32xf32> -> vector<8x32xf32>
    %67 = vector.extract_strided_slice %5 {offsets = [24, 0], sizes = [8, 96], strides = [1, 1]} : vector<32x96xf32> to vector<8x96xf32>
    %68 = vector.extract_strided_slice %67 {offsets = [0, 0], sizes = [8, 32], strides = [1, 1]} : vector<8x96xf32> to vector<8x32xf32>
    %69 = vector.extract_strided_slice %67 {offsets = [0, 32], sizes = [8, 32], strides = [1, 1]} : vector<8x96xf32> to vector<8x32xf32>
    %70 = vector.extract_strided_slice %67 {offsets = [0, 64], sizes = [8, 32], strides = [1, 1]} : vector<8x96xf32> to vector<8x32xf32>
    %cst_20 = arith.constant dense<0.000000e+00> : vector<8x8xf32>
    %71 = tpu.matmul %68, %69, %cst_20 {dimension_numbers = #tpu.dot_dimension_numbers<[1], [1], [0], [0], [0, 0, 1, 0], [], []>} : vector<8x32xf32>, vector<8x32xf32>, vector<8x8xf32> -> vector<8x8xf32>
    %cst_21 = arith.constant dense<0xFF800000> : vector<8xf32>
    %72 = vector.multi_reduction <maximumf>, %71, %cst_21 [1] : vector<8x8xf32> to vector<8xf32>
    %73 = vector.shape_cast %72 : vector<8xf32> to vector<8x1xf32>
    %74 = vector.broadcast %73 : vector<8x1xf32> to vector<8x8xf32>
    %75 = arith.subf %71, %74 : vector<8x8xf32>
    %76 = math.exp %75 : vector<8x8xf32>
    %cst_22 = arith.constant dense<0.000000e+00> : vector<8xf32>
    %77 = vector.multi_reduction <add>, %76, %cst_22 [1] : vector<8x8xf32> to vector<8xf32>
    %78 = vector.shape_cast %77 : vector<8xf32> to vector<8x1xf32>
    %79 = tpu.reciprocal %78 {approx = true} : vector<8x1xf32> -> vector<8x1xf32>
    %80 = arith.mulf %78, %79 : vector<8x1xf32>
    %cst_23 = arith.constant 2.000000e+00 : f32
    %81 = vector.broadcast %cst_23 : f32 to vector<8x1xf32>
    %82 = arith.subf %81, %80 : vector<8x1xf32>
    %83 = arith.mulf %79, %82 : vector<8x1xf32>
    %84 = vector.broadcast %83 : vector<8x1xf32> to vector<8x8xf32>
    %85 = arith.mulf %76, %84 : vector<8x8xf32>
    %cst_24 = arith.constant dense<0.000000e+00> : vector<8x32xf32>
    %86 = tpu.matmul %85, %70, %cst_24 {dimension_numbers = #tpu.dot_dimension_numbers<[1], [0], [0], [1], [0, 0, 1, 1], [], []>} : vector<8x8xf32>, vector<8x32xf32>, vector<8x32xf32> -> vector<8x32xf32>
    %87 = tpu.concatenate %66, %86 in 1 : vector<8x32xf32>, vector<8x32xf32> -> vector<8x64xf32>
    %88 = tpu.concatenate %46, %87 in 0 : vector<8x64xf32>, vector<8x64xf32> -> vector<16x64xf32>
    %c0_25 = arith.constant 0 : index
    %c0_26 = arith.constant 0 : index
    %89 = vector.load %arg3[%c0_25, %c0_26] : memref<16x64xf32, #tpu.memory_space<vmem>>, vector<16x64xf32>
    tpu.vector_store %arg3[%c0_25, %c0_26], %88 {strides = array<i32>} : memref<16x64xf32, #tpu.memory_space<vmem>>, vector<16x64xf32>,
    return
  }
}

</mosaic_0001>

<llo_original>
// kernel: self_attention_pallas.1
$region0: #{self_attention_pallas.1}
  #allocation0 [shape = 'u32[]', space=smem, size = 0x4, offset = 0x4, fixed_abs, tag = 'smem constant byte address 0x4 - core index']
  #allocation1 [shape = 'u32[144,128]{1,0:T(1,128)}', space=vmem, size = 0x12000, scoped, tag = 'internal scratch']
  %s0 = inlined_call_operand.hbm [shape: f32[32,32], index: 0, kind: input, shape index: {}]
  %s1 = inlined_call_operand.hbm [shape: f32[32,96], index: 1, kind: input, shape index: {}]
  %s2 = inlined_call_operand.vmem [shape: f32[1,96], index: 2, kind: input, shape index: {}]
  %s3 = inlined_call_operand.vmem [shape: f32[16,64], index: 3, kind: output, shape index: {}]
  %s4 = sld [smem:[#allocation0]]
  $region30: #{self_attention_pallas.1} parent=0
    _
  %s6 = ssub.s32 1, %s4
  %s7 = scalar_select 0, %s6, %s4
  $region1: #{self_attention_pallas.1} parent=0
    #allocation2 [shape = 'u8[16384]{0}', space=vmem, size = 0x4000, scoped, tag = 'input window, operand 0, single buffered']
    #allocation3 [shape = 's32[1]{0}', space=sflag, size = 0x4, scoped, tag = 'scoped memory for self_attention_pallas.1']
    #allocation4 [shape = 'u8[16384]{0}', space=vmem, size = 0x4000, scoped, tag = 'input window, operand 1, single buffered']
    #allocation5 [shape = 's32[1]{0}', space=sflag, size = 0x4, scoped, tag = 'scoped memory for self_attention_pallas.1']
    %8 = vsyncpa [#allocation3], 0
    %9 = vsyncpa [#allocation5], 0
    // Predicated region
    $region2: #{self_attention_pallas.1} parent=1 // pred_check
      _
    $region3: #{self_attention_pallas.1} parent=1 // pred_check_branch
      %11 = sbr.rel (0) target = $region5
    $region4: #{self_attention_pallas.1} parent=1 // pred_region
      %s13 = ssub.s32 512, 512
      %14 = vsyncadd [#allocation3], %s13
      %s15 = sshll.u32 [#allocation2], 4
      %s16 = int_to_ptr.vmem [resolvable:$true] %s15
      %21 = dma.hbm_to_vmem [thread:$0]  %s0, 512, %s16, [#allocation3], 128, 128, 8
    $region5: #{self_attention_pallas.1} parent=1 // pred_fallthru
      _
    // Predicated region
    $region6: #{self_attention_pallas.1} parent=1 // pred_check
      _
    $region7: #{self_attention_pallas.1} parent=1 // pred_check_branch
      %23 = sbr.rel (0) target = $region9
    $region8: #{self_attention_pallas.1} parent=1 // pred_region
      %s25 = ssub.s32 512, 512
      %26 = vsyncadd [#allocation5], %s25
      %s27 = sshll.u32 [#allocation4], 4
      %s28 = int_to_ptr.vmem [resolvable:$true] %s27
      %33 = dma.hbm_to_vmem [thread:$0]  %s1, 512, %s28, [#allocation5], 128, 128, 8
    $region9: #{self_attention_pallas.1} parent=1 // pred_fallthru
      _
    // Predicated region
    $region10: #{self_attention_pallas.1} parent=1 // pred_check
      _
    $region11: #{self_attention_pallas.1} parent=1 // pred_check_branch
      %35 = sbr.rel (0) target = $region13
    $region12: #{self_attention_pallas.1} parent=1 // pred_region
      _
    $region13: #{self_attention_pallas.1} parent=1 // pred_fallthru
      _
    // Predicated region
    $region14: #{self_attention_pallas.1} parent=1 // pred_check
      _
    $region15: #{self_attention_pallas.1} parent=1 // pred_check_branch
      %37 = sbr.rel (0) target = $region17
    $region16: #{self_attention_pallas.1} parent=1 // pred_region
      %38 = dma.done [#allocation3], 512
    $region17: #{self_attention_pallas.1} parent=1 // pred_fallthru
      _
    // Predicated region
    $region18: #{self_attention_pallas.1} parent=1 // pred_check
      _
    $region19: #{self_attention_pallas.1} parent=1 // pred_check_branch
      %40 = sbr.rel (0) target = $region21
    $region20: #{self_attention_pallas.1} parent=1 // pred_region
      %41 = dma.done [#allocation5], 512
    $region21: #{self_attention_pallas.1} parent=1 // pred_fallthru
      _
    %v42 = vld [vmem:[#allocation2] sm:$0xff]
    %v43 = vld [vmem:[#allocation2 + $0x8] sm:$0xff]
    %v44 = vld [vmem:[#allocation2 + $0x10] sm:$0xff]
    %v45 = vld [vmem:[#allocation2 + $0x18] sm:$0xff]
    %v46 = vld [vmem:[#allocation4] sm:$0xff]
    %v47 = vld [vmem:[#allocation4 + $0x8] sm:$0xff]
    %v48 = vld [vmem:[#allocation4 + $0x10] sm:$0xff]
    %v49 = vld [vmem:[#allocation4 + $0x18] sm:$0xff]
    %v50 = vld [vmem:[%s2] sm:$0x1]
    %v52 = vlaneseq
    %v53 = vshrl.u32 %v52, 7
    %v54 = vsub.s32 0, %v53
    %v55 = vrot.slane %v50, %v54
    %vm57 = vcmask 261120
    %v59 = vsel %vm57, %v42, 0
    %v62 = vsel %vm57, %v43, 0
    %v65 = vsel %vm57, %v44, 0
    %v68 = vsel %vm57, %v45, 0
    %70 = vmatprep.subr.mxu0 0.0
    %71 = vmatpush1.msra.mxu0 %v46
    %72 = vmatprep.subr.mxu0 0.0
    %73 = vmatpush1.msra.mxu0 %v47
    %74 = vmatprep.subr.mxu0 0.0
    %75 = vmatpush1.msra.mxu0 %v48
    %76 = vmatprep.subr.mxu0 0.0
    %77 = vmatpush1.msra.mxu0 %v49
    %78 = vmatprep.subr.mxu0 0.0
    %79 = vmatpush1.msra.mxu0 0.0
    %80 = vmatprep.subr.mxu0 0.0
    %81 = vmatpush1.msra.mxu0 0.0
    %82 = vmatprep.subr.mxu0 0.0
    %83 = vmatpush1.msra.mxu0 0.0
    %84 = vmatprep.subr.mxu0 0.0
    %85 = vmatpush1.msra.mxu0 0.0
    %86 = vmatprep.subr.mxu0 0.0
    %87 = vmatpush1.msra.mxu0 0.0
    %88 = vmatprep.subr.mxu0 0.0
    %89 = vmatpush1.msra.mxu0 0.0
    %90 = vmatprep.subr.mxu0 0.0
    %91 = vmatpush1.msra.mxu0 0.0
    %92 = vmatprep.subr.mxu0 0.0
    %93 = vmatpush1.msra.mxu0 0.0
    %94 = vmatprep.subr.mxu0 0.0
    %95 = vmatpush1.msra.mxu0 0.0
    %96 = vmatprep.subr.mxu0 0.0
    %97 = vmatpush1.msra.mxu0 0.0
    %98 = vmatprep.subr.mxu0 0.0
    %99 = vmatpush1.msra.mxu0 0.0
    %100 = vmatprep.subr.mxu0 0.0
    %101 = vmatpush1.msra.mxu0 0.0
    %102 = vmatprep.subr.mxu0 0.0
    %103 = vmatpush1.msra.mxu0 0.0
    %104 = vmatprep.subr.mxu0 0.0
    %105 = vmatpush1.msra.mxu0 0.0
    %106 = vmatprep.subr.mxu0 0.0
    %107 = vmatpush1.msra.mxu0 0.0
    %108 = vmatprep.subr.mxu0 0.0
    %109 = vmatpush1.msra.mxu0 0.0
    %110 = vmatprep.subr.mxu0 0.0
    %111 = vmatpush1.msra.mxu0 0.0
    %112 = vmatprep.subr.mxu0 0.0
    %113 = vmatpush1.msra.mxu0 0.0
    %114 = vmatprep.subr.mxu0 0.0
    %115 = vmatpush1.msra.mxu0 0.0
    %116 = vmatprep.subr.mxu0 0.0
    %117 = vmatpush1.msra.mxu0 0.0
    %118 = vmatprep.subr.mxu0 0.0
    %119 = vmatpush1.msra.mxu0 0.0
    %120 = vmatprep.subr.mxu0 0.0
    %121 = vmatpush1.msra.mxu0 0.0
    %122 = vmatprep.subr.mxu0 0.0
    %123 = vmatpush1.msra.mxu0 0.0
    %124 = vmatprep.subr.mxu0 0.0
    %125 = vmatpush1.msra.mxu0 0.0
    %126 = vmatprep.subr.mxu0 0.0
    %127 = vmatpush1.msra.mxu0 0.0
    %128 = vmatprep.subr.mxu0 0.0
    %129 = vmatpush1.msra.mxu0 0.0
    %130 = vmatprep.subr.mxu0 0.0
    %131 = vmatpush1.msra.mxu0 0.0
    %132 = vmatprep.subr.mxu0 0.0
    %133 = vmatpush1.msra.mxu0 0.0
    %134 = vmatprep.mubr.f32.mxu0 0.0
    %135 = vmatmul.mubr.f32.gmra.mrb[0].mxu0 %v59
    %v136 = vpop.f32.mrb[0].mxu0
    %v137 = vadd.f32 %v55, %v136
    %v138 = vpop.f32.mrb[0].mxu0
    %139 = vmatprep.mubr.f32.mxu0 0.0
    %140 = vmatmul.mubr.f32.gmra.mrb[0].mxu0 %v62
    %v141 = vpop.f32.mrb[0].mxu0
    %v142 = vadd.f32 %v55, %v141
    %v143 = vpop.f32.mrb[0].mxu0
    %144 = vmatprep.mubr.f32.mxu0 0.0
    %145 = vmatmul.mubr.f32.gmra.mrb[0].mxu0 %v65
    %v146 = vpop.f32.mrb[0].mxu0
    %v147 = vadd.f32 %v55, %v146
    %v148 = vpop.f32.mrb[0].mxu0
    %149 = vmatprep.mubr.f32.mxu0 0.0
    %150 = vmatmul.mubr.f32.gmra.mrb[0].mxu0 %v68
    %v151 = vpop.f32.mrb[0].mxu0
    %v152 = vadd.f32 %v55, %v151
    %v153 = vpop.f32.mrb[0].mxu0
    %154 = vdwg.mxu0
    %156 = vrot.lane.b32.xlu0 %v137, 96
    %v157 = vpop.permute.xlu0 %156
    %v158 = vsel %vm57, %v137, 0
    %v160 = vsel %vm57, %v157, 0
    %162 = vmatprep.subr.mxu0 0.0
    %163 = vmatpush1.xpose.msra.mxu0 %v160
    %164 = vmatprep.subr.mxu0 0.0
    %165 = vmatpush1.xpose.msra.mxu0 0.0
    %166 = vmatprep.subr.mxu0 0.0
    %167 = vmatpush1.xpose.msra.mxu0 0.0
    %168 = vmatprep.subr.mxu0 0.0
    %169 = vmatpush1.xpose.msra.mxu0 0.0
    %170 = vmatprep.subr.mxu0 0.0
    %171 = vmatpush1.xpose.msra.mxu0 0.0
    %172 = vmatprep.subr.mxu0 0.0
    %173 = vmatpush1.xpose.msra.mxu0 0.0
    %174 = vmatprep.subr.mxu0 0.0
    %175 = vmatpush1.xpose.msra.mxu0 0.0
    %176 = vmatprep.subr.mxu0 0.0
    %177 = vmatpush1.xpose.msra.mxu0 0.0
    %178 = vmatprep.subr.mxu0 0.0
    %179 = vmatpush1.xpose.msra.mxu0 0.0
    %180 = vmatprep.subr.mxu0 0.0
    %181 = vmatpush1.xpose.msra.mxu0 0.0
    %182 = vmatprep.subr.mxu0 0.0
    %183 = vmatpush1.xpose.msra.mxu0 0.0
    %184 = vmatprep.subr.mxu0 0.0
    %185 = vmatpush1.xpose.msra.mxu0 0.0
    %186 = vmatprep.subr.mxu0 0.0
    %187 = vmatpush1.xpose.msra.mxu0 0.0
    %188 = vmatprep.subr.mxu0 0.0
    %189 = vmatpush1.xpose.msra.mxu0 0.0
    %190 = vmatprep.subr.mxu0 0.0
    %191 = vmatpush1.xpose.msra.mxu0 0.0
    %192 = vmatprep.subr.mxu0 0.0
    %193 = vmatpush1.xpose.msra.mxu0 0.0
    %194 = vmatprep.subr.mxu0 0.0
    %195 = vmatpush1.xpose.msra.mxu0 0.0
    %196 = vmatprep.subr.mxu0 0.0
    %197 = vmatpush1.xpose.msra.mxu0 0.0
    %198 = vmatprep.subr.mxu0 0.0
    %199 = vmatpush1.xpose.msra.mxu0 0.0
    %200 = vmatprep.subr.mxu0 0.0
    %201 = vmatpush1.xpose.msra.mxu0 0.0
    %202 = vmatprep.subr.mxu0 0.0
    %203 = vmatpush1.xpose.msra.mxu0 0.0
    %204 = vmatprep.subr.mxu0 0.0
    %205 = vmatpush1.xpose.msra.mxu0 0.0
    %206 = vmatprep.subr.mxu0 0.0
    %207 = vmatpush1.xpose.msra.mxu0 0.0
    %208 = vmatprep.subr.mxu0 0.0
    %209 = vmatpush1.xpose.msra.mxu0 0.0
    %210 = vmatprep.subr.mxu0 0.0
    %211 = vmatpush1.xpose.msra.mxu0 0.0
    %212 = vmatprep.subr.mxu0 0.0
    %213 = vmatpush1.xpose.msra.mxu0 0.0
    %214 = vmatprep.subr.mxu0 0.0
    %215 = vmatpush1.xpose.msra.mxu0 0.0
    %216 = vmatprep.subr.mxu0 0.0
    %217 = vmatpush1.xpose.msra.mxu0 0.0
    %218 = vmatprep.subr.mxu0 0.0
    %219 = vmatpush1.xpose.msra.mxu0 0.0
    %220 = vmatprep.subr.mxu0 0.0
    %221 = vmatpush1.xpose.msra.mxu0 0.0
    %222 = vmatprep.subr.mxu0 0.0
    %223 = vmatpush1.xpose.msra.mxu0 0.0
    %224 = vmatprep.subr.mxu0 0.0
    %225 = vmatpush1.xpose.msra.mxu0 0.0
    %226 = vmatprep.mubr.f32.mxu0 0.0
    %227 = vmatmul.mubr.f32.gmra.mrb[0].mxu0 %v158
    %v228 = vpop.f32.mrb[0].mxu0
    %v229 = vadd.f32 0.0, %v228
    %v230 = vpop.f32.mrb[0].mxu0
    %231 = vdwg.mxu0
    %vm232 = vcmask 64512
    %v233 = vsel %vm232, %v229, -inf
    %234 = vmax.xlane.f32.xlu0 %v233
    %v235 = vpop.xlane.xlu0 %234
    %v236 = vsub.f32 %v229, %v235
    %v237 = vmul.f32 %v236, 1.442695
    %v238 = vpow.pop %v237
    %v239 = vsel %vm232, %v238, 0.0
    %240 = vadd.xlane.f32.xlu0 %v239
    %v241 = vpop.xlane.xlu0 %240
    %v242 = vrcp.pop %v241
    %v243 = vmul.f32 %v241, %v242
    %v244 = vsub.f32 2.0, %v243
    %v245 = vmul.f32 %v242, %v244
    %v246 = vmul.f32 %v238, %v245
    %247 = vrot.lane.b32.xlu0 %v137, 64
    %v248 = vpop.permute.xlu0 %247
    %v251 = vsel %vm232, %v246, 0
    %253 = vmatprep.subr.mxu0 0.0
    %254 = vmatpush1.msra.mxu0 %v248
    %255 = vmatprep.subr.mxu0 0.0
    %256 = vmatpush1.msra.mxu0 0.0
    %257 = vmatprep.subr.mxu0 0.0
    %258 = vmatpush1.msra.mxu0 0.0
    %259 = vmatprep.subr.mxu0 0.0
    %260 = vmatpush1.msra.mxu0 0.0
    %261 = vmatprep.subr.mxu0 0.0
    %262 = vmatpush1.msra.mxu0 0.0
    %263 = vmatprep.subr.mxu0 0.0
    %264 = vmatpush1.msra.mxu0 0.0
    %265 = vmatprep.subr.mxu0 0.0
    %266 = vmatpush1.msra.mxu0 0.0
    %267 = vmatprep.subr.mxu0 0.0
    %268 = vmatpush1.msra.mxu0 0.0
    %269 = vmatprep.subr.mxu0 0.0
    %270 = vmatpush1.msra.mxu0 0.0
    %271 = vmatprep.subr.mxu0 0.0
    %272 = vmatpush1.msra.mxu0 0.0
    %273 = vmatprep.subr.mxu0 0.0
    %274 = vmatpush1.msra.mxu0 0.0
    %275 = vmatprep.subr.mxu0 0.0
    %276 = vmatpush1.msra.mxu0 0.0
    %277 = vmatprep.subr.mxu0 0.0
    %278 = vmatpush1.msra.mxu0 0.0
    %279 = vmatprep.subr.mxu0 0.0
    %280 = vmatpush1.msra.mxu0 0.0
    %281 = vmatprep.subr.mxu0 0.0
    %282 = vmatpush1.msra.mxu0 0.0
    %283 = vmatprep.subr.mxu0 0.0
    %284 = vmatpush1.msra.mxu0 0.0
    %285 = vmatprep.subr.mxu0 0.0
    %286 = vmatpush1.msra.mxu0 0.0
    %287 = vmatprep.subr.mxu0 0.0
    %288 = vmatpush1.msra.mxu0 0.0
    %289 = vmatprep.subr.mxu0 0.0
    %290 = vmatpush1.msra.mxu0 0.0
    %291 = vmatprep.subr.mxu0 0.0
    %292 = vmatpush1.msra.mxu0 0.0
    %293 = vmatprep.subr.mxu0 0.0
    %294 = vmatpush1.msra.mxu0 0.0
    %295 = vmatprep.subr.mxu0 0.0
    %296 = vmatpush1.msra.mxu0 0.0
    %297 = vmatprep.subr.mxu0 0.0
    %298 = vmatpush1.msra.mxu0 0.0
    %299 = vmatprep.subr.mxu0 0.0
    %300 = vmatpush1.msra.mxu0 0.0
    %301 = vmatprep.subr.mxu0 0.0
    %302 = vmatpush1.msra.mxu0 0.0
    %303 = vmatprep.subr.mxu0 0.0
    %304 = vmatpush1.msra.mxu0 0.0
    %305 = vmatprep.subr.mxu0 0.0
    %306 = vmatpush1.msra.mxu0 0.0
    %307 = vmatprep.subr.mxu0 0.0
    %308 = vmatpush1.msra.mxu0 0.0
    %309 = vmatprep.subr.mxu0 0.0
    %310 = vmatpush1.msra.mxu0 0.0
    %311 = vmatprep.subr.mxu0 0.0
    %312 = vmatpush1.msra.mxu0 0.0
    %313 = vmatprep.subr.mxu0 0.0
    %314 = vmatpush1.msra.mxu0 0.0
    %315 = vmatprep.subr.mxu0 0.0
    %316 = vmatpush1.msra.mxu0 0.0
    %317 = vmatprep.mubr.f32.mxu0 0.0
    %318 = vmatmul.mubr.f32.gmra.mrb[0].mxu0 %v251
    %v319 = vpop.f32.mrb[0].mxu0
    %v320 = vadd.f32 0.0, %v319
    %v321 = vpop.f32.mrb[0].mxu0
    %322 = vdwg.mxu0
    %324 = vrot.lane.b32.xlu0 %v142, 96
    %v325 = vpop.permute.xlu0 %324
    %v326 = vsel %vm57, %v142, 0
    %v328 = vsel %vm57, %v325, 0
    %330 = vmatprep.subr.mxu0 0.0
    %331 = vmatpush1.xpose.msra.mxu0 %v328
    %332 = vmatprep.subr.mxu0 0.0
    %333 = vmatpush1.xpose.msra.mxu0 0.0
    %334 = vmatprep.subr.mxu0 0.0
    %335 = vmatpush1.xpose.msra.mxu0 0.0
    %336 = vmatprep.subr.mxu0 0.0
    %337 = vmatpush1.xpose.msra.mxu0 0.0
    %338 = vmatprep.subr.mxu0 0.0
    %339 = vmatpush1.xpose.msra.mxu0 0.0
    %340 = vmatprep.subr.mxu0 0.0
    %341 = vmatpush1.xpose.msra.mxu0 0.0
    %342 = vmatprep.subr.mxu0 0.0
    %343 = vmatpush1.xpose.msra.mxu0 0.0
    %344 = vmatprep.subr.mxu0 0.0
    %345 = vmatpush1.xpose.msra.mxu0 0.0
    %346 = vmatprep.subr.mxu0 0.0
    %347 = vmatpush1.xpose.msra.mxu0 0.0
    %348 = vmatprep.subr.mxu0 0.0
    %349 = vmatpush1.xpose.msra.mxu0 0.0
    %350 = vmatprep.subr.mxu0 0.0
    %351 = vmatpush1.xpose.msra.mxu0 0.0
    %352 = vmatprep.subr.mxu0 0.0
    %353 = vmatpush1.xpose.msra.mxu0 0.0
    %354 = vmatprep.subr.mxu0 0.0
    %355 = vmatpush1.xpose.msra.mxu0 0.0
    %356 = vmatprep.subr.mxu0 0.0
    %357 = vmatpush1.xpose.msra.mxu0 0.0
    %358 = vmatprep.subr.mxu0 0.0
    %359 = vmatpush1.xpose.msra.mxu0 0.0
    %360 = vmatprep.subr.mxu0 0.0
    %361 = vmatpush1.xpose.msra.mxu0 0.0
    %362 = vmatprep.subr.mxu0 0.0
    %363 = vmatpush1.xpose.msra.mxu0 0.0
    %364 = vmatprep.subr.mxu0 0.0
    %365 = vmatpush1.xpose.msra.mxu0 0.0
    %366 = vmatprep.subr.mxu0 0.0
    %367 = vmatpush1.xpose.msra.mxu0 0.0
    %368 = vmatprep.subr.mxu0 0.0
    %369 = vmatpush1.xpose.msra.mxu0 0.0
    %370 = vmatprep.subr.mxu0 0.0
    %371 = vmatpush1.xpose.msra.mxu0 0.0
    %372 = vmatprep.subr.mxu0 0.0
    %373 = vmatpush1.xpose.msra.mxu0 0.0
    %374 = vmatprep.subr.mxu0 0.0
    %375 = vmatpush1.xpose.msra.mxu0 0.0
    %376 = vmatprep.subr.mxu0 0.0
    %377 = vmatpush1.xpose.msra.mxu0 0.0
    %378 = vmatprep.subr.mxu0 0.0
    %379 = vmatpush1.xpose.msra.mxu0 0.0
    %380 = vmatprep.subr.mxu0 0.0
    %381 = vmatpush1.xpose.msra.mxu0 0.0
    %382 = vmatprep.subr.mxu0 0.0
    %383 = vmatpush1.xpose.msra.mxu0 0.0
    %384 = vmatprep.subr.mxu0 0.0
    %385 = vmatpush1.xpose.msra.mxu0 0.0
    %386 = vmatprep.subr.mxu0 0.0
    %387 = vmatpush1.xpose.msra.mxu0 0.0
    %388 = vmatprep.subr.mxu0 0.0
    %389 = vmatpush1.xpose.msra.mxu0 0.0
    %390 = vmatprep.subr.mxu0 0.0
    %391 = vmatpush1.xpose.msra.mxu0 0.0
    %392 = vmatprep.subr.mxu0 0.0
    %393 = vmatpush1.xpose.msra.mxu0 0.0
    %394 = vmatprep.mubr.f32.mxu0 0.0
    %395 = vmatmul.mubr.f32.gmra.mrb[0].mxu0 %v326
    %v396 = vpop.f32.mrb[0].mxu0
    %v397 = vadd.f32 0.0, %v396
    %v398 = vpop.f32.mrb[0].mxu0
    %399 = vdwg.mxu0
    %v400 = vsel %vm232, %v397, -inf
    %401 = vmax.xlane.f32.xlu0 %v400
    %v402 = vpop.xlane.xlu0 %401
    %v403 = vsub.f32 %v397, %v402
    %v404 = vmul.f32 %v403, 1.442695
    %v405 = vpow.pop %v404
    %v406 = vsel %vm232, %v405, 0.0
    %407 = vadd.xlane.f32.xlu0 %v406
    %v408 = vpop.xlane.xlu0 %407
    %v409 = vrcp.pop %v408
    %v410 = vmul.f32 %v408, %v409
    %v411 = vsub.f32 2.0, %v410
    %v412 = vmul.f32 %v409, %v411
    %v413 = vmul.f32 %v405, %v412
    %414 = vrot.lane.b32.xlu0 %v142, 64
    %v415 = vpop.permute.xlu0 %414
    %v418 = vsel %vm232, %v413, 0
    %420 = vmatprep.subr.mxu0 0.0
    %421 = vmatpush1.msra.mxu0 %v415
    %422 = vmatprep.subr.mxu0 0.0
    %423 = vmatpush1.msra.mxu0 0.0
    %424 = vmatprep.subr.mxu0 0.0
    %425 = vmatpush1.msra.mxu0 0.0
    %426 = vmatprep.subr.mxu0 0.0
    %427 = vmatpush1.msra.mxu0 0.0
    %428 = vmatprep.subr.mxu0 0.0
    %429 = vmatpush1.msra.mxu0 0.0
    %430 = vmatprep.subr.mxu0 0.0
    %431 = vmatpush1.msra.mxu0 0.0
    %432 = vmatprep.subr.mxu0 0.0
    %433 = vmatpush1.msra.mxu0 0.0
    %434 = vmatprep.subr.mxu0 0.0
    %435 = vmatpush1.msra.mxu0 0.0
    %436 = vmatprep.subr.mxu0 0.0
    %437 = vmatpush1.msra.mxu0 0.0
    %438 = vmatprep.subr.mxu0 0.0
    %439 = vmatpush1.msra.mxu0 0.0
    %440 = vmatprep.subr.mxu0 0.0
    %441 = vmatpush1.msra.mxu0 0.0
    %442 = vmatprep.subr.mxu0 0.0
    %443 = vmatpush1.msra.mxu0 0.0
    %444 = vmatprep.subr.mxu0 0.0
    %445 = vmatpush1.msra.mxu0 0.0
    %446 = vmatprep.subr.mxu0 0.0
    %447 = vmatpush1.msra.mxu0 0.0
    %448 = vmatprep.subr.mxu0 0.0
    %449 = vmatpush1.msra.mxu0 0.0
    %450 = vmatprep.subr.mxu0 0.0
    %451 = vmatpush1.msra.mxu0 0.0
    %452 = vmatprep.subr.mxu0 0.0
    %453 = vmatpush1.msra.mxu0 0.0
    %454 = vmatprep.subr.mxu0 0.0
    %455 = vmatpush1.msra.mxu0 0.0
    %456 = vmatprep.subr.mxu0 0.0
    %457 = vmatpush1.msra.mxu0 0.0
    %458 = vmatprep.subr.mxu0 0.0
    %459 = vmatpush1.msra.mxu0 0.0
    %460 = vmatprep.subr.mxu0 0.0
    %461 = vmatpush1.msra.mxu0 0.0
    %462 = vmatprep.subr.mxu0 0.0
    %463 = vmatpush1.msra.mxu0 0.0
    %464 = vmatprep.subr.mxu0 0.0
    %465 = vmatpush1.msra.mxu0 0.0
    %466 = vmatprep.subr.mxu0 0.0
    %467 = vmatpush1.msra.mxu0 0.0
    %468 = vmatprep.subr.mxu0 0.0
    %469 = vmatpush1.msra.mxu0 0.0
    %470 = vmatprep.subr.mxu0 0.0
    %471 = vmatpush1.msra.mxu0 0.0
    %472 = vmatprep.subr.mxu0 0.0
    %473 = vmatpush1.msra.mxu0 0.0
    %474 = vmatprep.subr.mxu0 0.0
    %475 = vmatpush1.msra.mxu0 0.0
    %476 = vmatprep.subr.mxu0 0.0
    %477 = vmatpush1.msra.mxu0 0.0
    %478 = vmatprep.subr.mxu0 0.0
    %479 = vmatpush1.msra.mxu0 0.0
    %480 = vmatprep.subr.mxu0 0.0
    %481 = vmatpush1.msra.mxu0 0.0
    %482 = vmatprep.subr.mxu0 0.0
    %483 = vmatpush1.msra.mxu0 0.0
    %484 = vmatprep.mubr.f32.mxu0 0.0
    %485 = vmatmul.mubr.f32.gmra.mrb[0].mxu0 %v418
    %v486 = vpop.f32.mrb[0].mxu0
    %v487 = vadd.f32 0.0, %v486
    %v488 = vpop.f32.mrb[0].mxu0
    %489 = vdwg.mxu0
    %491 = vrot.lane.b32.xlu0 %v487, 32
    %v492 = vpop.permute.xlu0 %491
    %v494 = vsel %vm57, %v320, %v492
    %496 = vrot.lane.b32.xlu0 %v147, 96
    %v497 = vpop.permute.xlu0 %496
    %v498 = vsel %vm57, %v147, 0
    %v500 = vsel %vm57, %v497, 0
    %502 = vmatprep.subr.mxu0 0.0
    %503 = vmatpush1.xpose.msra.mxu0 %v500
    %504 = vmatprep.subr.mxu0 0.0
    %505 = vmatpush1.xpose.msra.mxu0 0.0
    %506 = vmatprep.subr.mxu0 0.0
    %507 = vmatpush1.xpose.msra.mxu0 0.0
    %508 = vmatprep.subr.mxu0 0.0
    %509 = vmatpush1.xpose.msra.mxu0 0.0
    %510 = vmatprep.subr.mxu0 0.0
    %511 = vmatpush1.xpose.msra.mxu0 0.0
    %512 = vmatprep.subr.mxu0 0.0
    %513 = vmatpush1.xpose.msra.mxu0 0.0
    %514 = vmatprep.subr.mxu0 0.0
    %515 = vmatpush1.xpose.msra.mxu0 0.0
    %516 = vmatprep.subr.mxu0 0.0
    %517 = vmatpush1.xpose.msra.mxu0 0.0
    %518 = vmatprep.subr.mxu0 0.0
    %519 = vmatpush1.xpose.msra.mxu0 0.0
    %520 = vmatprep.subr.mxu0 0.0
    %521 = vmatpush1.xpose.msra.mxu0 0.0
    %522 = vmatprep.subr.mxu0 0.0
    %523 = vmatpush1.xpose.msra.mxu0 0.0
    %524 = vmatprep.subr.mxu0 0.0
    %525 = vmatpush1.xpose.msra.mxu0 0.0
    %526 = vmatprep.subr.mxu0 0.0
    %527 = vmatpush1.xpose.msra.mxu0 0.0
    %528 = vmatprep.subr.mxu0 0.0
    %529 = vmatpush1.xpose.msra.mxu0 0.0
    %530 = vmatprep.subr.mxu0 0.0
    %531 = vmatpush1.xpose.msra.mxu0 0.0
    %532 = vmatprep.subr.mxu0 0.0
    %533 = vmatpush1.xpose.msra.mxu0 0.0
    %534 = vmatprep.subr.mxu0 0.0
    %535 = vmatpush1.xpose.msra.mxu0 0.0
    %536 = vmatprep.subr.mxu0 0.0
    %537 = vmatpush1.xpose.msra.mxu0 0.0
    %538 = vmatprep.subr.mxu0 0.0
    %539 = vmatpush1.xpose.msra.mxu0 0.0
    %540 = vmatprep.subr.mxu0 0.0
    %541 = vmatpush1.xpose.msra.mxu0 0.0
    %542 = vmatprep.subr.mxu0 0.0
    %543 = vmatpush1.xpose.msra.mxu0 0.0
    %544 = vmatprep.subr.mxu0 0.0
    %545 = vmatpush1.xpose.msra.mxu0 0.0
    %546 = vmatprep.subr.mxu0 0.0
    %547 = vmatpush1.xpose.msra.mxu0 0.0
    %548 = vmatprep.subr.mxu0 0.0
    %549 = vmatpush1.xpose.msra.mxu0 0.0
    %550 = vmatprep.subr.mxu0 0.0
    %551 = vmatpush1.xpose.msra.mxu0 0.0
    %552 = vmatprep.subr.mxu0 0.0
    %553 = vmatpush1.xpose.msra.mxu0 0.0
    %554 = vmatprep.subr.mxu0 0.0
    %555 = vmatpush1.xpose.msra.mxu0 0.0
    %556 = vmatprep.subr.mxu0 0.0
    %557 = vmatpush1.xpose.msra.mxu0 0.0
    %558 = vmatprep.subr.mxu0 0.0
    %559 = vmatpush1.xpose.msra.mxu0 0.0
    %560 = vmatprep.subr.mxu0 0.0
    %561 = vmatpush1.xpose.msra.mxu0 0.0
    %562 = vmatprep.subr.mxu0 0.0
    %563 = vmatpush1.xpose.msra.mxu0 0.0
    %564 = vmatprep.subr.mxu0 0.0
    %565 = vmatpush1.xpose.msra.mxu0 0.0
    %566 = vmatprep.mubr.f32.mxu0 0.0
    %567 = vmatmul.mubr.f32.gmra.mrb[0].mxu0 %v498
    %v568 = vpop.f32.mrb[0].mxu0
    %v569 = vadd.f32 0.0, %v568
    %v570 = vpop.f32.mrb[0].mxu0
    %571 = vdwg.mxu0
    %v572 = vsel %vm232, %v569, -inf
    %573 = vmax.xlane.f32.xlu0 %v572
    %v574 = vpop.xlane.xlu0 %573
    %v575 = vsub.f32 %v569, %v574
    %v576 = vmul.f32 %v575, 1.442695
    %v577 = vpow.pop %v576
    %v578 = vsel %vm232, %v577, 0.0
    %579 = vadd.xlane.f32.xlu0 %v578
    %v580 = vpop.xlane.xlu0 %579
    %v581 = vrcp.pop %v580
    %v582 = vmul.f32 %v580, %v581
    %v583 = vsub.f32 2.0, %v582
    %v584 = vmul.f32 %v581, %v583
    %v585 = vmul.f32 %v577, %v584
    %586 = vrot.lane.b32.xlu0 %v147, 64
    %v587 = vpop.permute.xlu0 %586
    %v590 = vsel %vm232, %v585, 0
    %592 = vmatprep.subr.mxu0 0.0
    %593 = vmatpush1.msra.mxu0 %v587
    %594 = vmatprep.subr.mxu0 0.0
    %595 = vmatpush1.msra.mxu0 0.0
    %596 = vmatprep.subr.mxu0 0.0
    %597 = vmatpush1.msra.mxu0 0.0
    %598 = vmatprep.subr.mxu0 0.0
    %599 = vmatpush1.msra.mxu0 0.0
    %600 = vmatprep.subr.mxu0 0.0
    %601 = vmatpush1.msra.mxu0 0.0
    %602 = vmatprep.subr.mxu0 0.0
    %603 = vmatpush1.msra.mxu0 0.0
    %604 = vmatprep.subr.mxu0 0.0
    %605 = vmatpush1.msra.mxu0 0.0
    %606 = vmatprep.subr.mxu0 0.0
    %607 = vmatpush1.msra.mxu0 0.0
    %608 = vmatprep.subr.mxu0 0.0
    %609 = vmatpush1.msra.mxu0 0.0
    %610 = vmatprep.subr.mxu0 0.0
    %611 = vmatpush1.msra.mxu0 0.0
    %612 = vmatprep.subr.mxu0 0.0
    %613 = vmatpush1.msra.mxu0 0.0
    %614 = vmatprep.subr.mxu0 0.0
    %615 = vmatpush1.msra.mxu0 0.0
    %616 = vmatprep.subr.mxu0 0.0
    %617 = vmatpush1.msra.mxu0 0.0
    %618 = vmatprep.subr.mxu0 0.0
    %619 = vmatpush1.msra.mxu0 0.0
    %620 = vmatprep.subr.mxu0 0.0
    %621 = vmatpush1.msra.mxu0 0.0
    %622 = vmatprep.subr.mxu0 0.0
    %623 = vmatpush1.msra.mxu0 0.0
    %624 = vmatprep.subr.mxu0 0.0
    %625 = vmatpush1.msra.mxu0 0.0
    %626 = vmatprep.subr.mxu0 0.0
    %627 = vmatpush1.msra.mxu0 0.0
    %628 = vmatprep.subr.mxu0 0.0
    %629 = vmatpush1.msra.mxu0 0.0
    %630 = vmatprep.subr.mxu0 0.0
    %631 = vmatpush1.msra.mxu0 0.0
    %632 = vmatprep.subr.mxu0 0.0
    %633 = vmatpush1.msra.mxu0 0.0
    %634 = vmatprep.subr.mxu0 0.0
    %635 = vmatpush1.msra.mxu0 0.0
    %636 = vmatprep.subr.mxu0 0.0
    %637 = vmatpush1.msra.mxu0 0.0
    %638 = vmatprep.subr.mxu0 0.0
    %639 = vmatpush1.msra.mxu0 0.0
    %640 = vmatprep.subr.mxu0 0.0
    %641 = vmatpush1.msra.mxu0 0.0
    %642 = vmatprep.subr.mxu0 0.0
    %643 = vmatpush1.msra.mxu0 0.0
    %644 = vmatprep.subr.mxu0 0.0
    %645 = vmatpush1.msra.mxu0 0.0
    %646 = vmatprep.subr.mxu0 0.0
    %647 = vmatpush1.msra.mxu0 0.0
    %648 = vmatprep.subr.mxu0 0.0
    %649 = vmatpush1.msra.mxu0 0.0
    %650 = vmatprep.subr.mxu0 0.0
    %651 = vmatpush1.msra.mxu0 0.0
    %652 = vmatprep.subr.mxu0 0.0
    %653 = vmatpush1.msra.mxu0 0.0
    %654 = vmatprep.subr.mxu0 0.0
    %655 = vmatpush1.msra.mxu0 0.0
    %656 = vmatprep.mubr.f32.mxu0 0.0
    %657 = vmatmul.mubr.f32.gmra.mrb[0].mxu0 %v590
    %v658 = vpop.f32.mrb[0].mxu0
    %v659 = vadd.f32 0.0, %v658
    %v660 = vpop.f32.mrb[0].mxu0
    %661 = vdwg.mxu0
    %663 = vrot.lane.b32.xlu0 %v152, 96
    %v664 = vpop.permute.xlu0 %663
    %v665 = vsel %vm57, %v152, 0
    %v667 = vsel %vm57, %v664, 0
    %669 = vmatprep.subr.mxu0 0.0
    %670 = vmatpush1.xpose.msra.mxu0 %v667
    %671 = vmatprep.subr.mxu0 0.0
    %672 = vmatpush1.xpose.msra.mxu0 0.0
    %673 = vmatprep.subr.mxu0 0.0
    %674 = vmatpush1.xpose.msra.mxu0 0.0
    %675 = vmatprep.subr.mxu0 0.0
    %676 = vmatpush1.xpose.msra.mxu0 0.0
    %677 = vmatprep.subr.mxu0 0.0
    %678 = vmatpush1.xpose.msra.mxu0 0.0
    %679 = vmatprep.subr.mxu0 0.0
    %680 = vmatpush1.xpose.msra.mxu0 0.0
    %681 = vmatprep.subr.mxu0 0.0
    %682 = vmatpush1.xpose.msra.mxu0 0.0
    %683 = vmatprep.subr.mxu0 0.0
    %684 = vmatpush1.xpose.msra.mxu0 0.0
    %685 = vmatprep.subr.mxu0 0.0
    %686 = vmatpush1.xpose.msra.mxu0 0.0
    %687 = vmatprep.subr.mxu0 0.0
    %688 = vmatpush1.xpose.msra.mxu0 0.0
    %689 = vmatprep.subr.mxu0 0.0
    %690 = vmatpush1.xpose.msra.mxu0 0.0
    %691 = vmatprep.subr.mxu0 0.0
    %692 = vmatpush1.xpose.msra.mxu0 0.0
    %693 = vmatprep.subr.mxu0 0.0
    %694 = vmatpush1.xpose.msra.mxu0 0.0
    %695 = vmatprep.subr.mxu0 0.0
    %696 = vmatpush1.xpose.msra.mxu0 0.0
    %697 = vmatprep.subr.mxu0 0.0
    %698 = vmatpush1.xpose.msra.mxu0 0.0
    %699 = vmatprep.subr.mxu0 0.0
    %700 = vmatpush1.xpose.msra.mxu0 0.0
    %701 = vmatprep.subr.mxu0 0.0
    %702 = vmatpush1.xpose.msra.mxu0 0.0
    %703 = vmatprep.subr.mxu0 0.0
    %704 = vmatpush1.xpose.msra.mxu0 0.0
    %705 = vmatprep.subr.mxu0 0.0
    %706 = vmatpush1.xpose.msra.mxu0 0.0
    %707 = vmatprep.subr.mxu0 0.0
    %708 = vmatpush1.xpose.msra.mxu0 0.0
    %709 = vmatprep.subr.mxu0 0.0
    %710 = vmatpush1.xpose.msra.mxu0 0.0
    %711 = vmatprep.subr.mxu0 0.0
    %712 = vmatpush1.xpose.msra.mxu0 0.0
    %713 = vmatprep.subr.mxu0 0.0
    %714 = vmatpush1.xpose.msra.mxu0 0.0
    %715 = vmatprep.subr.mxu0 0.0
    %716 = vmatpush1.xpose.msra.mxu0 0.0
    %717 = vmatprep.subr.mxu0 0.0
    %718 = vmatpush1.xpose.msra.mxu0 0.0
    %719 = vmatprep.subr.mxu0 0.0
    %720 = vmatpush1.xpose.msra.mxu0 0.0
    %721 = vmatprep.subr.mxu0 0.0
    %722 = vmatpush1.xpose.msra.mxu0 0.0
    %723 = vmatprep.subr.mxu0 0.0
    %724 = vmatpush1.xpose.msra.mxu0 0.0
    %725 = vmatprep.subr.mxu0 0.0
    %726 = vmatpush1.xpose.msra.mxu0 0.0
    %727 = vmatprep.subr.mxu0 0.0
    %728 = vmatpush1.xpose.msra.mxu0 0.0
    %729 = vmatprep.subr.mxu0 0.0
    %730 = vmatpush1.xpose.msra.mxu0 0.0
    %731 = vmatprep.subr.mxu0 0.0
    %732 = vmatpush1.xpose.msra.mxu0 0.0
    %733 = vmatprep.mubr.f32.mxu0 0.0
    %734 = vmatmul.mubr.f32.gmra.mrb[0].mxu0 %v665
    %v735 = vpop.f32.mrb[0].mxu0
    %v736 = vadd.f32 0.0, %v735
    %v737 = vpop.f32.mrb[0].mxu0
    %738 = vdwg.mxu0
    %v739 = vsel %vm232, %v736, -inf
    %740 = vmax.xlane.f32.xlu0 %v739
    %v741 = vpop.xlane.xlu0 %740
    %v742 = vsub.f32 %v736, %v741
    %v743 = vmul.f32 %v742, 1.442695
    %v744 = vpow.pop %v743
    %v745 = vsel %vm232, %v744, 0.0
    %746 = vadd.xlane.f32.xlu0 %v745
    %v747 = vpop.xlane.xlu0 %746
    %v748 = vrcp.pop %v747
    %v749 = vmul.f32 %v747, %v748
    %v750 = vsub.f32 2.0, %v749
    %v751 = vmul.f32 %v748, %v750
    %v752 = vmul.f32 %v744, %v751
    %753 = vrot.lane.b32.xlu0 %v152, 64
    %v754 = vpop.permute.xlu0 %753
    %v757 = vsel %vm232, %v752, 0
    %759 = vmatprep.subr.mxu0 0.0
    %760 = vmatpush1.msra.mxu0 %v754
    %761 = vmatprep.subr.mxu0 0.0
    %762 = vmatpush1.msra.mxu0 0.0
    %763 = vmatprep.subr.mxu0 0.0
    %764 = vmatpush1.msra.mxu0 0.0
    %765 = vmatprep.subr.mxu0 0.0
    %766 = vmatpush1.msra.mxu0 0.0
    %767 = vmatprep.subr.mxu0 0.0
    %768 = vmatpush1.msra.mxu0 0.0
    %769 = vmatprep.subr.mxu0 0.0
    %770 = vmatpush1.msra.mxu0 0.0
    %771 = vmatprep.subr.mxu0 0.0
    %772 = vmatpush1.msra.mxu0 0.0
    %773 = vmatprep.subr.mxu0 0.0
    %774 = vmatpush1.msra.mxu0 0.0
    %775 = vmatprep.subr.mxu0 0.0
    %776 = vmatpush1.msra.mxu0 0.0
    %777 = vmatprep.subr.mxu0 0.0
    %778 = vmatpush1.msra.mxu0 0.0
    %779 = vmatprep.subr.mxu0 0.0
    %780 = vmatpush1.msra.mxu0 0.0
    %781 = vmatprep.subr.mxu0 0.0
    %782 = vmatpush1.msra.mxu0 0.0
    %783 = vmatprep.subr.mxu0 0.0
    %784 = vmatpush1.msra.mxu0 0.0
    %785 = vmatprep.subr.mxu0 0.0
    %786 = vmatpush1.msra.mxu0 0.0
    %787 = vmatprep.subr.mxu0 0.0
    %788 = vmatpush1.msra.mxu0 0.0
    %789 = vmatprep.subr.mxu0 0.0
    %790 = vmatpush1.msra.mxu0 0.0
    %791 = vmatprep.subr.mxu0 0.0
    %792 = vmatpush1.msra.mxu0 0.0
    %793 = vmatprep.subr.mxu0 0.0
    %794 = vmatpush1.msra.mxu0 0.0
    %795 = vmatprep.subr.mxu0 0.0
    %796 = vmatpush1.msra.mxu0 0.0
    %797 = vmatprep.subr.mxu0 0.0
    %798 = vmatpush1.msra.mxu0 0.0
    %799 = vmatprep.subr.mxu0 0.0
    %800 = vmatpush1.msra.mxu0 0.0
    %801 = vmatprep.subr.mxu0 0.0
    %802 = vmatpush1.msra.mxu0 0.0
    %803 = vmatprep.subr.mxu0 0.0
    %804 = vmatpush1.msra.mxu0 0.0
    %805 = vmatprep.subr.mxu0 0.0
    %806 = vmatpush1.msra.mxu0 0.0
    %807 = vmatprep.subr.mxu0 0.0
    %808 = vmatpush1.msra.mxu0 0.0
    %809 = vmatprep.subr.mxu0 0.0
    %810 = vmatpush1.msra.mxu0 0.0
    %811 = vmatprep.subr.mxu0 0.0
    %812 = vmatpush1.msra.mxu0 0.0
    %813 = vmatprep.subr.mxu0 0.0
    %814 = vmatpush1.msra.mxu0 0.0
    %815 = vmatprep.subr.mxu0 0.0
    %816 = vmatpush1.msra.mxu0 0.0
    %817 = vmatprep.subr.mxu0 0.0
    %818 = vmatpush1.msra.mxu0 0.0
    %819 = vmatprep.subr.mxu0 0.0
    %820 = vmatpush1.msra.mxu0 0.0
    %821 = vmatprep.subr.mxu0 0.0
    %822 = vmatpush1.msra.mxu0 0.0
    %823 = vmatprep.mubr.f32.mxu0 0.0
    %824 = vmatmul.mubr.f32.gmra.mrb[0].mxu0 %v757
    %v825 = vpop.f32.mrb[0].mxu0
    %v826 = vadd.f32 0.0, %v825
    %v827 = vpop.f32.mrb[0].mxu0
    %828 = vdwg.mxu0
    %830 = vrot.lane.b32.xlu0 %v826, 32
    %v831 = vpop.permute.xlu0 %830
    %v833 = vsel %vm57, %v659, %v831
    %vm834 = vcmask 523264
    %835 = vst.msk [vmem:[%s3] sm:$0xff] %vm834, %v494
    %836 = vst.msk [vmem:[%s3 + $0x8] sm:$0xff] %vm834, %v833
    // Predicated region
    $region22: #{self_attention_pallas.1} parent=1 // pred_check
      _
    $region23: #{self_attention_pallas.1} parent=1 // pred_check_branch
      %838 = sbr.rel (0) target = $region25
    $region24: #{self_attention_pallas.1} parent=1 // pred_region
      _
    $region25: #{self_attention_pallas.1} parent=1 // pred_fallthru
      _
    // Predicated region
    $region26: #{self_attention_pallas.1} parent=1 // pred_check
      _
    $region27: #{self_attention_pallas.1} parent=1 // pred_check_branch
      %840 = sbr.rel (0) target = $region29
    $region28: #{self_attention_pallas.1} parent=1 // pred_region
      _
    $region29: #{self_attention_pallas.1} parent=1 // pred_fallthru
      _
    %841 = vsyncpa [#allocation3], 1
    %842 = vsyncpa [#allocation5], 1

</llo_original>
